<compile_context>
chip_gen: v6e
topology: v6e:2x2x1
jax: 0.10.0
libtpu: 0.0.40
codegen_flags: <defaults>
</compile_context>

<pallas_src>
import functools

import jax
import jax.numpy as jnp
from jax import lax
from jax.experimental import pallas as pl
from jax.experimental.pallas import tpu as pltpu

EPS = 1e-6


def _round_up(n, m):
    return ((n + m - 1) // m) * m


def _vmem_budget_bytes():
    """Physical per-core VMEM minus headroom (v7x-safe cap)."""
    cap = 64 << 20  # conservative default (v7x per-TC VMEM)
    try:
        info = pltpu.get_tpu_info()
        cap = int(getattr(info, "vmem_capacity_bytes", cap))
    except Exception:
        pass
    return max(cap - (8 << 20), 32 << 20)


def _layernorm_f32(x, a2, b2, d_real, approx_recip):
    """torch-style LayerNorm (unbiased std) in f32; padded lanes of x are zero."""
    x = x.astype(jnp.float32)
    mean = jnp.sum(x, axis=-1, keepdims=True) * (1.0 / d_real)
    diff = x - mean
    if d_real < x.shape[-1]:
        # Mask padded lanes out of the variance reduction (x is zero there, but
        # diff = -mean would otherwise pollute the sum of squares).
        lane = lax.broadcasted_iota(jnp.int32, x.shape, 1)
        diff = jnp.where(lane < d_real, diff, 0.0)
    denom = max(d_real - 1, 1)  # guard d_real == 1 (torch.std is NaN there)
    var = jnp.sum(diff * diff, axis=-1, keepdims=True) * (1.0 / denom)
    std = jnp.sqrt(var)
    inv = pl.reciprocal(std + EPS, approx=approx_recip)
    return a2.astype(jnp.float32) * diff * inv + b2.astype(jnp.float32)


# ---------------------------------------------------------------------------
# Path A: weight resident in VMEM, 1-D grid over row tiles.  x read exactly once.
# ---------------------------------------------------------------------------
def _kernel_resident_w(x_ref, a2_ref, b2_ref, bias_ref, w_ref, o_ref, *,
                       d_real, approx_recip, matmul_dtype):
    x = x_ref[...].astype(jnp.float32)                              # (tm, Dp)
    normed = _layernorm_f32(x, a2_ref[...], b2_ref[...], d_real, approx_recip)
    y = jnp.dot(normed.astype(matmul_dtype), w_ref[...],
                preferred_element_type=jnp.float32)                 # MXU
    y = y + bias_ref[...].astype(jnp.float32)
    # dropout: inference mode (identity) + residual, lane-dense store
    o_ref[...] = (x + y).astype(o_ref.dtype)


# ---------------------------------------------------------------------------
# Path B: weight streamed in (Dp, tn) column tiles, 2-D grid (row tiles, col tiles).
# ---------------------------------------------------------------------------
def _kernel_streamed_w(x_row_ref, x_col_ref, a2_ref, b2_ref, bias_ref,
                       w_ref, o_ref, normed_ref, *, d_real, approx_recip):
    j = pl.program_id(1)

    # LayerNorm computed once per row tile, reused for every weight column tile.
    @pl.when(j == 0)
    def _():
        normed = _layernorm_f32(x_row_ref[...], a2_ref[...], b2_ref[...],
                                d_real, approx_recip)
        normed_ref[...] = normed.astype(normed_ref.dtype)

    y = jnp.dot(normed_ref[...], w_ref[...], preferred_element_type=jnp.float32)
    y = y + bias_ref[...].astype(jnp.float32)
    # dropout: inference mode (identity) + residual, lane-dense (tm, tn) store
    o_ref[...] = (x_col_ref[...].astype(jnp.float32) + y).astype(o_ref.dtype)


def sublayer_connection(x, a_2, b_2, w, bias, *,
                        tm=None, tn=512,
                        matmul_dtype=jnp.bfloat16,
                        approx_reciprocal=True,
                        stream_weights=None):
    """Fused SublayerConnection: x + Linear(LayerNorm(x))  (dropout = eval / identity).

    x: (B, S, D); a_2, b_2, bias: (D,); w: (D, D).
    tm: row tile (default 512, auto-shrunk to fit VMEM / guarantee >=2 row tiles).
    tn: max weight/output column tile for the streaming path (multiple of 128).
    matmul_dtype: MXU operand dtype (bf16 default; jnp.float32 for exact parity).
    approx_reciprocal: use the EUP approximate reciprocal for 1/(std+eps).
    stream_weights: None = auto (based on VMEM budget), True forces streaming.
    """
    B, S, D = x.shape
    N = B * S
    matmul_dtype = jnp.dtype(matmul_dtype)
    out_dtype = x.dtype
    bw = matmul_dtype.itemsize
    bx = jnp.dtype(x.dtype).itemsize
    budget = _vmem_budget_bytes()

    # --- lane padding: keep tn large, pad D up to a multiple of tn if cheap ---
    tn_req = max(128, (min(int(tn), 512) // 128) * 128)
    d128 = _round_up(D, 128)
    tn, Dp = 128, d128
    for cand in (512, 384, 256, 128):
        if cand > tn_req:
            continue
        dp_c = _round_up(D, cand)
        if cand == 128 or (dp_c - d128) * 4 <= d128:   # at most ~25% extra padding
            tn, Dp = cand, dp_c
            break

    # --- row tiling ---
    if tm is None:
        tm = 512
    tm = max(8, _round_up(min(int(tm), _round_up(N, 8)), 8))
    if N > 8:
        # >= 2 row tiles so the 'parallel' axis can split across 2 TCs (v7x).
        tm = min(tm, max(8, _round_up((N + 1) // 2, 8)))

    # --- choose path against the VMEM budget (double-buffering assumed) ---
    def _resident_bytes(tm_):
        return (2 * tm_ * Dp * bx          # x row blocks
                + 2 * tm_ * Dp * bx        # output row blocks
                + 2 * Dp * Dp * bw         # full weight (conservatively x2)
                + 8 * Dp * 4)              # a_2 / b_2 / bias

    def _stream_bytes(tm_, tn_):
        return (2 * tm_ * Dp * bx          # x row block (LN)
                + 2 * tm_ * tn_ * bx       # x residual column tiles
                + 2 * Dp * tn_ * bw        # weight column tiles
                + 2 * tm_ * tn_ * bx       # output tiles
                + tm_ * Dp * bw            # normed scratch
                + 8 * Dp * 4)

    if stream_weights is None:
        stream_weights = int(1.15 * _resident_bytes(tm)) > budget
        if stream_weights:
            # A smaller row tile with a resident weight beats streaming (weight is
            # then read only once and x only once); try before giving up.
            for tm_try in (256, 128):
                if tm_try < tm and int(1.15 * _resident_bytes(tm_try)) <= budget:
                    tm, stream_weights = tm_try, False
                    break

    if stream_weights:
        while int(1.15 * _stream_bytes(tm, tn)) > budget and tm > 128:
            tm = _round_up(tm // 2, 8)
        while int(1.15 * _stream_bytes(tm, tn)) > budget and tn > 128:
            tn -= 128
            while Dp % tn != 0:
                tn -= 128

    Np = _round_up(N, tm)

    # --- host-side padding only when actually needed ---
    x2 = x.reshape(N, D)
    if Np != N or Dp != D:
        x2 = jnp.pad(x2, ((0, Np - N), (0, Dp - D)))

    def _pad_vec(v):
        v = v.reshape(1, D)
        return jnp.pad(v, ((0, 0), (0, Dp - D))) if Dp != D else v

    a2 = _pad_vec(a_2)
    b2 = _pad_vec(b_2)
    bb = _pad_vec(bias)
    wq = w.astype(matmul_dtype)
    if Dp != D:
        wq = jnp.pad(wq, ((0, Dp - D), (0, Dp - D)))

    # --- cost estimate (helps XLA schedule around the custom call) ---
    n_row_tiles = Np // tm
    bytes_accessed = (Np * Dp * bx * (2 if stream_weights else 1)   # x reads
                      + Dp * Dp * bw * (n_row_tiles if stream_weights else 1)
                      + Np * Dp * bx)                               # output writes
    cost = pl.CostEstimate(flops=2 * Np * Dp * Dp + 10 * Np * Dp,
                           transcendentals=2 * Np,
                           bytes_accessed=int(bytes_accessed))

    est = _stream_bytes(tm, tn) if stream_weights else _resident_bytes(tm)
    vmem_limit = int(min(max(int(1.2 * est) + (2 << 20), 16 << 20), budget))

    if not stream_weights:
        kernel = functools.partial(_kernel_resident_w, d_real=D,
                                   approx_recip=approx_reciprocal,
                                   matmul_dtype=matmul_dtype)
        grid_spec = pltpu.PrefetchScalarGridSpec(
            num_scalar_prefetch=0,
            grid=(Np // tm,),
            in_specs=[
                pl.BlockSpec((tm, Dp), lambda i: (i, 0)),   # x row block (read once)
                pl.BlockSpec((1, Dp), lambda i: (0, 0)),    # a_2 (constant)
                pl.BlockSpec((1, Dp), lambda i: (0, 0)),    # b_2 (constant)
                pl.BlockSpec((1, Dp), lambda i: (0, 0)),    # sublayer bias (constant)
                pl.BlockSpec((Dp, Dp), lambda i: (0, 0)),   # full weight (resident)
            ],
            out_specs=pl.BlockSpec((tm, Dp), lambda i: (i, 0)),
        )
        out = pl.pallas_call(
            kernel,
            out_shape=jax.ShapeDtypeStruct((Np, Dp), out_dtype),
            grid_spec=grid_spec,
            compiler_params=pltpu.CompilerParams(
                dimension_semantics=("parallel",),
                vmem_limit_bytes=vmem_limit),
            cost_estimate=cost,
        )(x2, a2, b2, bb, wq)
    else:
        kernel = functools.partial(_kernel_streamed_w, d_real=D,
                                   approx_recip=approx_reciprocal)
        grid_spec = pltpu.PrefetchScalarGridSpec(
            num_scalar_prefetch=0,
            grid=(Np // tm, Dp // tn),
            in_specs=[
                # Full row block for LN; index independent of j -> one DMA per row tile.
                pl.BlockSpec((tm, Dp), lambda i, j: (i, 0)),
                # Column slice of x for the residual add (static lane slicing).
                pl.BlockSpec((tm, tn), lambda i, j: (i, j)),
                pl.BlockSpec((1, Dp), lambda i, j: (0, 0)),    # a_2
                pl.BlockSpec((1, Dp), lambda i, j: (0, 0)),    # b_2
                pl.BlockSpec((1, tn), lambda i, j: (0, j)),    # bias column tile
                pl.BlockSpec((Dp, tn), lambda i, j: (0, j)),   # weight column tile
            ],
            out_specs=pl.BlockSpec((tm, tn), lambda i, j: (i, j)),
            scratch_shapes=[pltpu.VMEM((tm, Dp), matmul_dtype)],  # LayerNorm(x)
        )
        out = pl.pallas_call(
            kernel,
            out_shape=jax.ShapeDtypeStruct((Np, Dp), out_dtype),
            grid_spec=grid_spec,
            compiler_params=pltpu.CompilerParams(
                dimension_semantics=("parallel", "arbitrary"),
                vmem_limit_bytes=vmem_limit),
            cost_estimate=cost,
        )(x2, x2, a2, b2, bb, wq)

    if Np != N or Dp != D:
        out = out[:N, :D]
    return out.reshape(B, S, D)


def _reference(x, a_2, b_2, w, bias):
    xf = x.astype(jnp.float32)
    mean = jnp.mean(xf, axis=-1, keepdims=True)
    diff = xf - mean
    var_unbiased = jnp.sum(diff * diff, axis=-1, keepdims=True) / (x.shape[-1] - 1)
    std = jnp.sqrt(var_unbiased)
    normed = a_2 * diff / (std + EPS) + b_2
    y = jnp.dot(normed, w.astype(jnp.float32),
                precision=lax.Precision.HIGHEST) + bias
    return (xf + y).astype(x.dtype)


if __name__ == "__main__":
    root = jax.random.PRNGKey(0)
    k1, k2, k3, k4, k5, k6 = jax.random.split(root, 6)

    # ---- Test A: small shape (resident-weight path) ----
    B, S, D = 2, 8, 32
    x = jax.random.normal(k1, (B, S, D), dtype=jnp.float32)
    a_2 = jnp.ones((D,), dtype=jnp.float32)          # LayerNorm params per __init__
    b_2 = jnp.zeros((D,), dtype=jnp.float32)
    w = jax.random.normal(k2, (D, D), dtype=jnp.float32) * 0.05
    bias = jax.random.normal(k3, (D,), dtype=jnp.float32) * 0.01
    ref = _reference(x, a_2, b_2, w, bias)

    # Default (performance) config: bf16 MXU operands + approx reciprocal.
    out = jax.block_until_ready(sublayer_connection(x, a_2, b_2, w, bias))
    assert out.shape == x.shape and out.dtype == x.dtype
    assert jnp.allclose(out, ref, atol=3e-2, rtol=3e-2), "bf16 path mismatch"

    # Exact-parity config: f32 MXU + exact reciprocal.
    out_exact = jax.block_until_ready(
        sublayer_connection(x, a_2, b_2, w, bias,
                            matmul_dtype=jnp.float32, approx_reciprocal=False))
    assert jnp.allclose(out_exact, ref, atol=1e-4, rtol=1e-4), "f32 path mismatch"

    # ---- Test B: force the weight-streaming (2-D grid) path ----
    B2, S2, D2 = 2, 32, 256
    x_b = jax.random.normal(k4, (B2, S2, D2), dtype=jnp.float32)
    a2_b = jnp.ones((D2,), dtype=jnp.float32)
    b2_b = jnp.zeros((D2,), dtype=jnp.float32)
    w_b = jax.random.normal(k5, (D2, D2), dtype=jnp.float32) * 0.05
    bias_b = jax.random.normal(k6, (D2,), dtype=jnp.float32) * 0.01
    ref_b = _reference(x_b, a2_b, b2_b, w_b, bias_b)
    out_b = jax.block_until_ready(
        sublayer_connection(x_b, a2_b, b2_b, w_b, bias_b, tm=32, tn=128,
                            matmul_dtype=jnp.float32, approx_reciprocal=False,
                            stream_weights=True))
    assert out_b.shape == x_b.shape and out_b.dtype == x_b.dtype
    assert jnp.allclose(out_b, ref_b, atol=1e-3, rtol=1e-3), "streaming path mismatch"

    print("KERNEL_OK")
</pallas_src>

<mosaic_0001>
module attributes {stable_mosaic.version = 11 : i64} {
  func.func @_kernel_resident_w(%arg0: i32, %arg1: memref<8x128xf32, #tpu.memory_space<vmem>>, %arg2: memref<1x128xf32, #tpu.memory_space<vmem>>, %arg3: memref<1x128xf32, #tpu.memory_space<vmem>>, %arg4: memref<1x128xf32, #tpu.memory_space<vmem>>, %arg5: memref<128x128xbf16, #tpu.memory_space<vmem>>, %arg6: memref<8x128xf32, #tpu.memory_space<vmem>>) attributes {dimension_semantics = [#tpu.dimension_semantics<parallel>], iteration_bounds = array<i64: 2>, scalar_prefetch = 0 : i64, scratch_operands = 0 : i64, tpu.core_type = #tpu.core_type<tc>, window_params = [{transform_indices = @transform_0, window_bounds = array<i64: 8, 128>}, {pipeline_mode = #tpu.pipeline_mode<synchronous>, transform_indices = @transform_1, window_bounds = array<i64: 1, 128>}, {pipeline_mode = #tpu.pipeline_mode<synchronous>, transform_indices = @transform_2, window_bounds = array<i64: 1, 128>}, {pipeline_mode = #tpu.pipeline_mode<synchronous>, transform_indices = @transform_3, window_bounds = array<i64: 1, 128>}, {pipeline_mode = #tpu.pipeline_mode<synchronous>, transform_indices = @transform_4, window_bounds = array<i64: 128, 128>}, {transform_indices = @transform_5, window_bounds = array<i64: 8, 128>}]} {
    %c0 = arith.constant 0 : index
    %c0_0 = arith.constant 0 : index
    %0 = vector.load %arg1[%c0, %c0_0] : memref<8x128xf32, #tpu.memory_space<vmem>>, vector<8x128xf32>
    %c0_1 = arith.constant 0 : index
    %c0_2 = arith.constant 0 : index
    %1 = vector.load %arg2[%c0_1, %c0_2] : memref<1x128xf32, #tpu.memory_space<vmem>>, vector<1x128xf32>
    %c0_3 = arith.constant 0 : index
    %c0_4 = arith.constant 0 : index
    %2 = vector.load %arg3[%c0_3, %c0_4] : memref<1x128xf32, #tpu.memory_space<vmem>>, vector<1x128xf32>
    %cst = arith.constant dense<0.000000e+00> : vector<8xf32>
    %3 = vector.multi_reduction <add>, %0, %cst [1] : vector<8x128xf32> to vector<8xf32>
    %4 = vector.shape_cast %3 : vector<8xf32> to vector<8x1xf32>
    %cst_5 = arith.constant 3.125000e-02 : f32
    %5 = vector.broadcast %cst_5 : f32 to vector<8x1xf32>
    %6 = arith.mulf %4, %5 : vector<8x1xf32>
    %7 = vector.broadcast %6 : vector<8x1xf32> to vector<8x128xf32>
    %8 = arith.subf %0, %7 : vector<8x128xf32>
    %9 = tpu.iota {dimensions = array<i32: 1>} : vector<8x128xi32>
    %c32_i32 = arith.constant 32 : i32
    %10 = vector.broadcast %c32_i32 : i32 to vector<8x128xi32>
    %11 = arith.cmpi slt, %9, %10 : vector<8x128xi32>
    %cst_6 = arith.constant 0.000000e+00 : f32
    %12 = vector.broadcast %cst_6 : f32 to vector<8x128xf32>
    %13 = arith.select %11, %8, %12 : vector<8x128xi1>, vector<8x128xf32>
    %14 = arith.mulf %13, %13 : vector<8x128xf32>
    %cst_7 = arith.constant dense<0.000000e+00> : vector<8xf32>
    %15 = vector.multi_reduction <add>, %14, %cst_7 [1] : vector<8x128xf32> to vector<8xf32>
    %16 = vector.shape_cast %15 : vector<8xf32> to vector<8x1xf32>
    %cst_8 = arith.constant 0.0322580636 : f32
    %17 = vector.broadcast %cst_8 : f32 to vector<8x1xf32>
    %18 = arith.mulf %16, %17 : vector<8x1xf32>
    %19 = math.sqrt %18 : vector<8x1xf32>
    %cst_9 = arith.constant 9.99999997E-7 : f32
    %20 = vector.broadcast %cst_9 : f32 to vector<8x1xf32>
    %21 = arith.addf %19, %20 : vector<8x1xf32>
    %22 = tpu.reciprocal %21 {approx = true} : vector<8x1xf32> -> vector<8x1xf32>
    %23 = vector.broadcast %1 : vector<1x128xf32> to vector<8x128xf32>
    %24 = arith.mulf %23, %13 : vector<8x128xf32>
    %25 = vector.broadcast %22 : vector<8x1xf32> to vector<8x128xf32>
    %26 = arith.mulf %24, %25 : vector<8x128xf32>
    %27 = vector.broadcast %2 : vector<1x128xf32> to vector<8x128xf32>
    %28 = arith.addf %26, %27 : vector<8x128xf32>
    %29 = arith.truncf %28 : vector<8x128xf32> to vector<8x128xbf16>
    %c0_10 = arith.constant 0 : index
    %c0_11 = arith.constant 0 : index
    %30 = vector.load %arg5[%c0_10, %c0_11] : memref<128x128xbf16, #tpu.memory_space<vmem>>, vector<128x128xbf16>
    %cst_12 = arith.constant dense<0.000000e+00> : vector<8x128xf32>
    %31 = tpu.matmul %29, %30, %cst_12 {dimension_numbers = #tpu.dot_dimension_numbers<[1], [0], [0], [1], [0, 0, 1, 1], [], []>} : vector<8x128xbf16>, vector<128x128xbf16>, vector<8x128xf32> -> vector<8x128xf32>
    %c0_13 = arith.constant 0 : index
    %c0_14 = arith.constant 0 : index
    %32 = vector.load %arg4[%c0_13, %c0_14] : memref<1x128xf32, #tpu.memory_space<vmem>>, vector<1x128xf32>
    %33 = vector.broadcast %32 : vector<1x128xf32> to vector<8x128xf32>
    %34 = arith.addf %31, %33 : vector<8x128xf32>
    %35 = arith.addf %0, %34 : vector<8x128xf32>
    %c0_15 = arith.constant 0 : index
    %c0_16 = arith.constant 0 : index
    %36 = vector.load %arg6[%c0_15, %c0_16] : memref<8x128xf32, #tpu.memory_space<vmem>>, vector<8x128xf32>
    tpu.vector_store %arg6[%c0_15, %c0_16], %35 {strides = array<i32>} : memref<8x128xf32, #tpu.memory_space<vmem>>, vector<8x128xf32>,
    return
  }
  func.func @transform_0(%arg0: i32) -> (i32, i32) {
    %c0_i32 = arith.constant 0 : i32
    %c0_i32_0 = arith.constant 0 : i32
    return %arg0, %c0_i32 : i32, i32
  }
  func.func @transform_1(%arg0: i32) -> (i32, i32) {
    %c0_i32 = arith.constant 0 : i32
    %c0_i32_0 = arith.constant 0 : i32
    %c0_i32_1 = arith.constant 0 : i32
    return %c0_i32, %c0_i32_0 : i32, i32
  }
  func.func @transform_2(%arg0: i32) -> (i32, i32) {
    %c0_i32 = arith.constant 0 : i32
    %c0_i32_0 = arith.constant 0 : i32
    %c0_i32_1 = arith.constant 0 : i32
    return %c0_i32, %c0_i32_0 : i32, i32
  }
  func.func @transform_3(%arg0: i32) -> (i32, i32) {
    %c0_i32 = arith.constant 0 : i32
    %c0_i32_0 = arith.constant 0 : i32
    %c0_i32_1 = arith.constant 0 : i32
    return %c0_i32, %c0_i32_0 : i32, i32
  }
  func.func @transform_4(%arg0: i32) -> (i32, i32) {
    %c0_i32 = arith.constant 0 : i32
    %c0_i32_0 = arith.constant 0 : i32
    %c0_i32_1 = arith.constant 0 : i32
    return %c0_i32, %c0_i32_0 : i32, i32
  }
  func.func @transform_5(%arg0: i32) -> (i32, i32) {
    %c0_i32 = arith.constant 0 : i32
    %c0_i32_0 = arith.constant 0 : i32
    return %arg0, %c0_i32 : i32, i32
  }
}

</mosaic_0001>

<llo_original>
// kernel: tpu_custom_call.1
$region0: #{tpu_custom_call.1}
  #allocation0 [shape = 'u32[]', space=smem, size = 0x4, offset = 0x4, fixed_abs, tag = 'smem constant byte address 0x4 - core index']
  #allocation1 [shape = 'u32[144,128]{1,0:T(1,128)}', space=vmem, size = 0x12000, scoped, tag = 'internal scratch']
  %s0 = inlined_call_operand.hbm [shape: f32[16,128], index: 0, kind: input, shape index: {}]
  %s1 = inlined_call_operand.vmem [shape: f32[1,128], index: 1, kind: input, shape index: {}]
  %s2 = inlined_call_operand.vmem [shape: f32[1,128], index: 2, kind: input, shape index: {}]
  %s3 = inlined_call_operand.vmem [shape: f32[1,128], index: 3, kind: input, shape index: {}]
  %s4 = inlined_call_operand.hbm [shape: bf16[128,128], index: 4, kind: input, shape index: {}]
  %s5 = inlined_call_operand.hbm [shape: f32[16,128], index: 5, kind: output, shape index: {}]
  %s6 = sld [smem:[#allocation0]]
  $region61: #{tpu_custom_call.1} parent=0
    _
  %s8 = ssub.s32 1, %s6
  %s9 = scalar_select 0, %s8, %s6
  $region1: #{tpu_custom_call.1} parent=0
    #allocation2 [shape = 'u8[8192]{0}', space=vmem, size = 0x2000, scoped, tag = 'input window, operand 0']
    #allocation3 [shape = 's32[2]{0}', space=sflag, size = 0x8, scoped, tag = 'scoped memory for tpu_custom_call.1']
    #allocation4 [shape = 's32[2]{0}', space=sflag, size = 0x8, scoped, tag = 'scoped memory for tpu_custom_call.1']
    #allocation5 [shape = 'u8[32768]{0}', space=vmem, size = 0x8000, scoped, tag = 'input window, operand 4, single buffered']
    #allocation6 [shape = 's32[1]{0}', space=sflag, size = 0x4, scoped, tag = 'scoped memory for tpu_custom_call.1']
    #allocation7 [shape = 'u8[8192]{0}', space=vmem, size = 0x2000, scoped, tag = 'output window, operand 0']
    %10 = vsyncpa [#allocation3], 0
    %s11 = scalar_lea.sflag [#allocation3], 1
    %12 = vsyncpa %s11, 0
    %13 = vsyncpa [#allocation6], 0
    %14 = vsyncpa [#allocation4], 0
    %s15 = scalar_lea.sflag [#allocation4], 1
    %16 = vsyncpa %s15, 0
    loop: start=0, step=1, limit=4
    $region2: #{tpu_custom_call.1} parent=1 // loop_pre_header
      _
    $region3: #{tpu_custom_call.1} parent=1 // loop_header
      %s18 = sphi 0, %s22
      %p19 = scmp.ge.s32.totalorder %s18, 4
      %s28 = sphi 0, %s30
      %s31 = sphi 0, %s28
      %s32 = sphi 0, %s31
      %s48 = sphi 0, %s32
      %s52 = sphi 0, %s52
      %s54 = sphi 0, %s52
      %s55 = sphi 0, %s54
      %s69 = sphi 0, %s55
      %s73 = sphi 0, %s73
      %s75 = sphi 0, %s73
      %s76 = sphi 0, %s75
      %s90 = sphi 0, %s76
      %s94 = sphi 0, %s94
      %s96 = sphi 0, %s94
      %s97 = sphi 0, %s96
      %s111 = sphi 0, %s97
      %s115 = sphi 0, %s115
      %s117 = sphi 0, %s115
      %s118 = sphi 0, %s117
      %s132 = sphi 0, %s118
      %s138 = sphi 0, %s140
      %s141 = sphi 0, %s138
      %s142 = sphi 0, %s141
      %s158 = sphi 0, %s142
    $region4: #{tpu_custom_call.1} parent=1 // loop_header_branch
      %21 = sbr.rel (%p19) target = $region8
    $region5: #{tpu_custom_call.1} parent=1 // loop_body
      %s23 = ssub.s32 %s18, 1
      %s24 = ssub.s32 %s18, 2
      %s25 = sadd.s32 %s18, 1
      %s26 = ssub.s32 %s18, %s25
      %p27 = scmp.eq.s32.totalorder %s26, 0
      %s29 = sadd.s32 %s28, 1
      %s30 = scalar_select %p27, %s28, %s29
      %p33 = pneg %p27
      %p34 = scmp.eq.s32.totalorder %s18, 1
      %p35 = por %p33, %p34
      %p36 = scmp.ne.s32.totalorder %s28, %s31
      %p37 = scmp.eq.s32.totalorder %s18, 0
      %p38 = por %p36, %p37
      %p39 = scmp.ne.s32.totalorder %s28, %s31
      %p40 = scmp.eq.s32.totalorder %s23, 1
      %p41 = por %p39, %p40
      %p42 = scmp.ne.s32.totalorder %s31, %s32
      %p43 = scmp.eq.s32.totalorder %s23, 0
      %p44 = por %p42, %p43
      %p45 = scmp.ne.s32.totalorder %s31, %s32
      %p46 = scmp.eq.s32.totalorder %s24, 1
      %p47 = por %p45, %p46
      %p49 = scmp.ne.s32.totalorder %s32, %s48
      %p50 = scmp.eq.s32.totalorder %s24, 0
      %p51 = por %p49, %p50
      %s53 = sadd.s32 %s52, 1
      %p56 = scmp.eq.s32.totalorder %s18, 1
      %p57 = scmp.ne.s32.totalorder %s52, %s54
      %p58 = scmp.eq.s32.totalorder %s18, 0
      %p59 = por %p57, %p58
      %p60 = scmp.ne.s32.totalorder %s52, %s54
      %p61 = scmp.eq.s32.totalorder %s23, 1
      %p62 = por %p60, %p61
      %p63 = scmp.ne.s32.totalorder %s54, %s55
      %p64 = scmp.eq.s32.totalorder %s23, 0
      %p65 = por %p63, %p64
      %p66 = scmp.ne.s32.totalorder %s54, %s55
      %p67 = scmp.eq.s32.totalorder %s24, 1
      %p68 = por %p66, %p67
      %p70 = scmp.ne.s32.totalorder %s55, %s69
      %p71 = scmp.eq.s32.totalorder %s24, 0
      %p72 = por %p70, %p71
      %s74 = sadd.s32 %s73, 1
      %p77 = scmp.eq.s32.totalorder %s18, 1
      %p78 = scmp.ne.s32.totalorder %s73, %s75
      %p79 = scmp.eq.s32.totalorder %s18, 0
      %p80 = por %p78, %p79
      %p81 = scmp.ne.s32.totalorder %s73, %s75
      %p82 = scmp.eq.s32.totalorder %s23, 1
      %p83 = por %p81, %p82
      %p84 = scmp.ne.s32.totalorder %s75, %s76
      %p85 = scmp.eq.s32.totalorder %s23, 0
      %p86 = por %p84, %p85
      %p87 = scmp.ne.s32.totalorder %s75, %s76
      %p88 = scmp.eq.s32.totalorder %s24, 1
      %p89 = por %p87, %p88
      %p91 = scmp.ne.s32.totalorder %s76, %s90
      %p92 = scmp.eq.s32.totalorder %s24, 0
      %p93 = por %p91, %p92
      %s95 = sadd.s32 %s94, 1
      %p98 = scmp.eq.s32.totalorder %s18, 1
      %p99 = scmp.ne.s32.totalorder %s94, %s96
      %p100 = scmp.eq.s32.totalorder %s18, 0
      %p101 = por %p99, %p100
      %p102 = scmp.ne.s32.totalorder %s94, %s96
      %p103 = scmp.eq.s32.totalorder %s23, 1
      %p104 = por %p102, %p103
      %p105 = scmp.ne.s32.totalorder %s96, %s97
      %p106 = scmp.eq.s32.totalorder %s23, 0
      %p107 = por %p105, %p106
      %p108 = scmp.ne.s32.totalorder %s96, %s97
      %p109 = scmp.eq.s32.totalorder %s24, 1
      %p110 = por %p108, %p109
      %p112 = scmp.ne.s32.totalorder %s97, %s111
      %p113 = scmp.eq.s32.totalorder %s24, 0
      %p114 = por %p112, %p113
      %s116 = sadd.s32 %s115, 1
      %p119 = scmp.eq.s32.totalorder %s18, 1
      %p120 = scmp.ne.s32.totalorder %s115, %s117
      %p121 = scmp.eq.s32.totalorder %s18, 0
      %p122 = por %p120, %p121
      %p123 = scmp.ne.s32.totalorder %s115, %s117
      %p124 = scmp.eq.s32.totalorder %s23, 1
      %p125 = por %p123, %p124
      %p126 = scmp.ne.s32.totalorder %s117, %s118
      %p127 = scmp.eq.s32.totalorder %s23, 0
      %p128 = por %p126, %p127
      %p129 = scmp.ne.s32.totalorder %s117, %s118
      %p130 = scmp.eq.s32.totalorder %s24, 1
      %p131 = por %p129, %p130
      %p133 = scmp.ne.s32.totalorder %s118, %s132
      %p134 = scmp.eq.s32.totalorder %s24, 0
      %p135 = por %p133, %p134
      %s136 = ssub.s32 %s18, %s25
      %p137 = scmp.eq.s32.totalorder %s136, 0
      %s139 = sadd.s32 %s138, 1
      %s140 = scalar_select %p137, %s138, %s139
      %p143 = pneg %p137
      %p144 = scmp.eq.s32.totalorder %s18, 1
      %p145 = por %p143, %p144
      %p146 = scmp.ne.s32.totalorder %s138, %s141
      %p147 = scmp.eq.s32.totalorder %s18, 0
      %p148 = por %p146, %p147
      %p149 = scmp.ne.s32.totalorder %s138, %s141
      %p150 = scmp.eq.s32.totalorder %s23, 1
      %p151 = por %p149, %p150
      %p152 = scmp.ne.s32.totalorder %s141, %s142
      %p153 = scmp.eq.s32.totalorder %s23, 0
      %p154 = por %p152, %p153
      %p155 = scmp.ne.s32.totalorder %s141, %s142
      %p156 = scmp.eq.s32.totalorder %s24, 1
      %p157 = por %p155, %p156
      %p159 = scmp.ne.s32.totalorder %s142, %s158
      %p160 = scmp.eq.s32.totalorder %s24, 0
      %p161 = por %p159, %p160
      %p162 = scmp.le.s32.totalorder 1, %s18
      %p163 = scmp.lt.s32.totalorder %s18, 3
      %p164 = pnand %p162, %p163
      %p165 = pneg %p164
      // Predicated region
      $region9: #{tpu_custom_call.1} parent=5 // pred_check
        _
      $region10: #{tpu_custom_call.1} parent=5 // pred_check_branch
        %167 = sbr.rel (%p164) target = $region12
      $region11: #{tpu_custom_call.1} parent=5 // pred_region
        %s168 = ssub.s32 %s18, 1
        // Predicated region
        $region13: #{tpu_custom_call.1} parent=11 // pred_check
          %p169 = pneg %p65
        $region14: #{tpu_custom_call.1} parent=11 // pred_check_branch
          %171 = sbr.rel (%p169) target = $region16
        $region15: #{tpu_custom_call.1} parent=11 // pred_region
          _
        $region16: #{tpu_custom_call.1} parent=11 // pred_fallthru
          _
        // Predicated region
        $region17: #{tpu_custom_call.1} parent=11 // pred_check
          %p172 = pneg %p86
        $region18: #{tpu_custom_call.1} parent=11 // pred_check_branch
          %174 = sbr.rel (%p172) target = $region20
        $region19: #{tpu_custom_call.1} parent=11 // pred_region
          _
        $region20: #{tpu_custom_call.1} parent=11 // pred_fallthru
          _
        // Predicated region
        $region21: #{tpu_custom_call.1} parent=11 // pred_check
          %p175 = pneg %p107
        $region22: #{tpu_custom_call.1} parent=11 // pred_check_branch
          %177 = sbr.rel (%p175) target = $region24
        $region23: #{tpu_custom_call.1} parent=11 // pred_region
          _
        $region24: #{tpu_custom_call.1} parent=11 // pred_fallthru
          _
        // Predicated region
        $region25: #{tpu_custom_call.1} parent=11 // pred_check
          %p178 = pneg %p128
        $region26: #{tpu_custom_call.1} parent=11 // pred_check_branch
          %180 = sbr.rel (%p178) target = $region28
        $region27: #{tpu_custom_call.1} parent=11 // pred_region
          %s182 = ssub.s32 1024, 1024
          %183 = vsyncadd [#allocation6], %s182
          %s184 = sshll.u32 [#allocation5], 4
          %s185 = int_to_ptr.vmem [resolvable:$true] %s184
          %190 = dma.hbm_to_vmem [thread:$0]  %s4, 1024, %s185, [#allocation6], 64, 64, 4
        $region28: #{tpu_custom_call.1} parent=11 // pred_fallthru
          _
      $region12: #{tpu_custom_call.1} parent=5 // pred_fallthru
        _
      %p191 = scmp.lt.s32.totalorder %s18, 2
      // Predicated region
      $region29: #{tpu_custom_call.1} parent=5 // pred_check
        %p192 = pneg %p191
      $region30: #{tpu_custom_call.1} parent=5 // pred_check_branch
        %194 = sbr.rel (%p192) target = $region32
      $region31: #{tpu_custom_call.1} parent=5 // pred_region
        // Predicated region
        $region33: #{tpu_custom_call.1} parent=31 // pred_check
          %p195 = pneg %p38
        $region34: #{tpu_custom_call.1} parent=31 // pred_check_branch
          %197 = sbr.rel (%p195) target = $region36
        $region35: #{tpu_custom_call.1} parent=31 // pred_region
          %s198 = sand.u32 %s28, 1
          %s199 = scalar_lea.sflag [#allocation3], %s198
          %s200 = sand.u32 %s28, 1
          %s201 = smul.addr %s200, 8
          %s202 = scalar_lea.vmem [#allocation2], %s201
          %s204 = ssub.s32 128, 128
          %205 = vsyncadd %s199, %s204
          %s206 = smul.addr %s18, 128
          %s207 = scalar_lea.hbm %s0, %s206
          %s209 = sshll.u32 %s202, 4
          %s210 = int_to_ptr.vmem [resolvable:$true] %s209
          %212 = dma.hbm_to_vmem [thread:$0]  %s207, 128, %s210, %s199
        $region36: #{tpu_custom_call.1} parent=31 // pred_fallthru
          _
      $region32: #{tpu_custom_call.1} parent=5 // pred_fallthru
        _
      %p213 = scmp.le.s32.totalorder 1, %s18
      %p214 = scmp.lt.s32.totalorder %s18, 3
      %p215 = pnand %p213, %p214
      %p216 = pneg %p215
      // Predicated region
      $region37: #{tpu_custom_call.1} parent=5 // pred_check
        _
      $region38: #{tpu_custom_call.1} parent=5 // pred_check_branch
        %218 = sbr.rel (%p215) target = $region40
      $region39: #{tpu_custom_call.1} parent=5 // pred_region
        %s219 = ssub.s32 %s18, 1
        %s220 = sand.u32 %s31, 1
        %s221 = scalar_lea.sflag [#allocation3], %s220
        %s222 = sand.u32 %s31, 1
        %s223 = smul.addr %s222, 8
        %s224 = scalar_lea.vmem [#allocation2], %s223
        // Predicated region
        $region41: #{tpu_custom_call.1} parent=39 // pred_check
          %p225 = pneg %p44
        $region42: #{tpu_custom_call.1} parent=39 // pred_check_branch
          %227 = sbr.rel (%p225) target = $region44
        $region43: #{tpu_custom_call.1} parent=39 // pred_region
          %228 = dma.done %s221, 128
        $region44: #{tpu_custom_call.1} parent=39 // pred_fallthru
          _
        // Predicated region
        $region45: #{tpu_custom_call.1} parent=39 // pred_check
          %p229 = pneg %p128
        $region46: #{tpu_custom_call.1} parent=39 // pred_check_branch
          %231 = sbr.rel (%p229) target = $region48
        $region47: #{tpu_custom_call.1} parent=39 // pred_region
          %232 = dma.done [#allocation6], 1024
        $region48: #{tpu_custom_call.1} parent=39 // pred_fallthru
          _
        %s233 = sand.u32 %s31, 1
        %s234 = scalar_lea.sflag [#allocation3], %s233
        %s235 = sand.u32 %s31, 1
        %s236 = smul.addr %s235, 8
        %s237 = scalar_lea.vmem [#allocation2], %s236
        %p238 = pneg %p44
        %p239 = pneg %p41
        %p240 = pneg %p65
        %p241 = pneg %p62
        %p242 = pneg %p86
        %p243 = pneg %p83
        %p244 = pneg %p107
        %p245 = pneg %p104
        %p246 = pneg %p128
        %p247 = pneg %p125
        %p248 = pneg %p154
        %p249 = pneg %p151
        %s250 = sand.u32 %s141, 1
        %s251 = scalar_lea.sflag [#allocation4], %s250
        %s252 = sand.u32 %s141, 1
        %s253 = smul.addr %s252, 8
        %s254 = scalar_lea.vmem [#allocation7], %s253
        %v256 = vld [vmem:[%s224] sm:$0xff]
        %v257 = vld [vmem:[%s1] sm:$0x1]
        %v258 = vld [vmem:[%s2] sm:$0x1]
        %259 = vadd.xlane.f32.xlu0 %v256
        %v260 = vpop.xlane.xlu0 %259
        %v261 = vmul.f32 %v260, 0.03125
        %v262 = vsub.f32 %v256, %v261
        %v263 = vlaneseq
        %v264 = vand.u32 %v263, 127
        %vm265 = vcmp.lt.s32.totalorder %v264, 32
        %v266 = vsel %vm265, %v262, 0.0
        %v267 = vmul.f32 %v266, %v266
        %268 = vadd.xlane.f32.xlu0 %v267
        %v269 = vpop.xlane.xlu0 %268
        %v270 = vmul.f32 %v269, 0.032258064
        %v271 = vrsqrt.pop %v270
        %v272 = vmul.f32 %v270, %v271
        %vm273 = vcmp.eq.f32.partialorder %v270, inf
        %v274 = vsel %vm273, %v270, %v272
        %vm275 = vcmp.eq.f32.partialorder %v270, 0.0
        %v276 = vand.u32 %v270, 2147483648
        %v277 = vsel %vm275, %v276, %v274
        %v278 = vadd.f32 %v277, 1e-06
        %v279 = vrcp.pop %v278
        %v281 = vlaneseq
        %v282 = vshrl.u32 %v281, 7
        %v283 = vsub.s32 0, %v282
        %v284 = vrot.slane %v257, %v283
        %v286 = vmul.f32 %v284, %v266
        %v287 = vmul.f32 %v286, %v279
        %v289 = vlaneseq
        %v290 = vshrl.u32 %v289, 7
        %v291 = vsub.s32 0, %v290
        %v292 = vrot.slane %v258, %v291
        %v294 = vadd.f32 %v287, %v292
        %v295 = vpack.c.bf16 %v294, %v294
        %v296 = vld [vmem:[#allocation5] sm:$0xf]
        %v297 = vld [vmem:[#allocation5 + $0x4] sm:$0xf]
        %v298 = vld [vmem:[#allocation5 + $0x8] sm:$0xf]
        %v299 = vld [vmem:[#allocation5 + $0xc] sm:$0xf]
        %v300 = vld [vmem:[#allocation5 + $0x10] sm:$0xf]
        %v301 = vld [vmem:[#allocation5 + $0x14] sm:$0xf]
        %v302 = vld [vmem:[#allocation5 + $0x18] sm:$0xf]
        %v303 = vld [vmem:[#allocation5 + $0x1c] sm:$0xf]
        %v304 = vld [vmem:[#allocation5 + $0x20] sm:$0xf]
        %v305 = vld [vmem:[#allocation5 + $0x24] sm:$0xf]
        %v306 = vld [vmem:[#allocation5 + $0x28] sm:$0xf]
        %v307 = vld [vmem:[#allocation5 + $0x2c] sm:$0xf]
        %v308 = vld [vmem:[#allocation5 + $0x30] sm:$0xf]
        %v309 = vld [vmem:[#allocation5 + $0x34] sm:$0xf]
        %v310 = vld [vmem:[#allocation5 + $0x38] sm:$0xf]
        %v311 = vld [vmem:[#allocation5 + $0x3c] sm:$0xf]
        %v312 = vld [vmem:[%s3] sm:$0x1]
        %v314 = vlaneseq
        %v315 = vshrl.u32 %v314, 7
        %v316 = vsub.s32 0, %v315
        %v317 = vrot.slane %v312, %v316
        %v335 = vunpack.c.l.b16 %v296
        %v336 = vunpack.c.l.b16 %v297
        %v337 = vunpack.c.l.b16 %v298
        %v338 = vunpack.c.l.b16 %v299
        %v339 = vunpack.c.l.b16 %v300
        %v340 = vunpack.c.l.b16 %v301
        %v341 = vunpack.c.l.b16 %v302
        %v342 = vunpack.c.l.b16 %v303
        %v343 = vunpack.c.l.b16 %v304
        %v344 = vunpack.c.l.b16 %v305
        %v345 = vunpack.c.l.b16 %v306
        %v346 = vunpack.c.l.b16 %v307
        %v347 = vunpack.c.l.b16 %v308
        %v348 = vunpack.c.l.b16 %v309
        %v349 = vunpack.c.l.b16 %v310
        %v350 = vunpack.c.l.b16 %v311
        %v351 = vpack.c.b16 %v336, %v335
        %v352 = vpack.c.b16 %v338, %v337
        %v353 = vpack.c.b16 %v340, %v339
        %v354 = vpack.c.b16 %v342, %v341
        %v355 = vpack.c.b16 %v344, %v343
        %v356 = vpack.c.b16 %v346, %v345
        %v357 = vpack.c.b16 %v348, %v347
        %v358 = vpack.c.b16 %v350, %v349
        %367 = vmatprep.subr.bf16.mxu0 0
        %368 = vmatpush1.bf16.msra.mxu0 %v358
        %369 = vmatprep.subr.bf16.mxu0 0
        %370 = vmatpush1.bf16.msra.mxu0 %v357
        %371 = vmatprep.subr.bf16.mxu0 0
        %372 = vmatpush1.bf16.msra.mxu0 %v356
        %373 = vmatprep.subr.bf16.mxu0 0
        %374 = vmatpush1.bf16.msra.mxu0 %v355
        %375 = vmatprep.subr.bf16.mxu0 0
        %376 = vmatpush1.bf16.msra.mxu0 %v354
        %377 = vmatprep.subr.bf16.mxu0 0
        %378 = vmatpush1.bf16.msra.mxu0 %v353
        %379 = vmatprep.subr.bf16.mxu0 0
        %380 = vmatpush1.bf16.msra.mxu0 %v352
        %381 = vmatprep.subr.bf16.mxu0 0
        %382 = vmatpush1.bf16.msra.mxu0 %v351
        %383 = vmatprep.subr.bf16.mxu0 0
        %384 = vmatpush2.bf16.msra.mxu0 0
        %385 = vmatprep.subr.bf16.mxu0 0
        %386 = vmatpush2.bf16.msra.mxu0 0
        %387 = vmatprep.subr.bf16.mxu0 0
        %388 = vmatpush2.bf16.msra.mxu0 0
        %389 = vmatprep.subr.bf16.mxu0 0
        %390 = vmatpush2.bf16.msra.mxu0 0
        %391 = vmatprep.subr.bf16.mxu0 0
        %392 = vmatpush2.bf16.msra.mxu0 0
        %393 = vmatprep.subr.bf16.mxu0 0
        %394 = vmatpush2.bf16.msra.mxu0 0
        %395 = vmatprep.subr.bf16.mxu0 0
        %396 = vmatpush2.bf16.msra.mxu0 0
        %397 = vmatprep.subr.bf16.mxu0 0
        %398 = vmatpush2.bf16.msra.mxu0 0
        %399 = vmatprep.mubr.bf16.mxu0 0
        %400 = vmatmul.mubr.bf16.gmra.mxu0 %v295
        %v401 = vpop.f32.mrf.mxu0
        %v402 = vadd.f32 %v317, %v401
        %v403 = vpop.f32.mrf.mxu0
        %v404 = vpop.f32.mrf.mxu0
        %v405 = vpop.f32.mrf.mxu0
        %406 = vdwg.mxu0
        %v407 = vadd.f32 %v256, %v402
        %408 = vst [vmem:[%s254] sm:$0xff] %v407
        %s409 = sand.u32 %s141, 1
        %s410 = scalar_lea.sflag [#allocation4], %s409
        %s411 = sand.u32 %s141, 1
        %s412 = smul.addr %s411, 8
        %s413 = scalar_lea.vmem [#allocation7], %s412
        // Predicated region
        $region49: #{tpu_custom_call.1} parent=39 // pred_check
          %p414 = pneg %p151
        $region50: #{tpu_custom_call.1} parent=39 // pred_check_branch
          %416 = sbr.rel (%p414) target = $region52
        $region51: #{tpu_custom_call.1} parent=39 // pred_region
          %s418 = ssub.s32 128, 128
          %419 = vsyncadd %s410, %s418
          %s420 = smul.addr %s23, 128
          %s421 = scalar_lea.hbm %s5, %s420
          %s423 = sshll.u32 %s413, 4
          %s424 = int_to_ptr.vmem [resolvable:$true] %s423
          %426 = dma.vmem_to_hbm [thread:$0]  %s424, 128, %s421, %s410
        $region52: #{tpu_custom_call.1} parent=39 // pred_fallthru
          _
      $region40: #{tpu_custom_call.1} parent=5 // pred_fallthru
        _
      %p427 = scmp.le.s32.totalorder 2, %s18
      // Predicated region
      $region53: #{tpu_custom_call.1} parent=5 // pred_check
        %p428 = pneg %p427
      $region54: #{tpu_custom_call.1} parent=5 // pred_check_branch
        %430 = sbr.rel (%p428) target = $region56
      $region55: #{tpu_custom_call.1} parent=5 // pred_region
        %s431 = ssub.s32 %s18, 2
        // Predicated region
        $region57: #{tpu_custom_call.1} parent=55 // pred_check
          %p432 = pneg %p157
        $region58: #{tpu_custom_call.1} parent=55 // pred_check_branch
          %434 = sbr.rel (%p432) target = $region60
        $region59: #{tpu_custom_call.1} parent=55 // pred_region
          %s435 = sand.u32 %s142, 1
          %s436 = scalar_lea.sflag [#allocation4], %s435
          %s437 = sand.u32 %s142, 1
          %s438 = smul.addr %s437, 8
          %s439 = scalar_lea.vmem [#allocation7], %s438
          %440 = dma.done %s436, 128
        $region60: #{tpu_custom_call.1} parent=55 // pred_fallthru
          _
      $region56: #{tpu_custom_call.1} parent=5 // pred_fallthru
        _
    $region6: #{tpu_custom_call.1} parent=1 // loop_footer
      %s22 = sadd.s32 1, %s18
    $region7: #{tpu_custom_call.1} parent=1 // loop_footer_branch
      %17 = sbr.rel target = $region3
    $region8: #{tpu_custom_call.1} parent=1 // loop_exit
      _
    %441 = vsyncpa [#allocation3], 1
    %s442 = scalar_lea.sflag [#allocation3], 1
    %443 = vsyncpa %s442, 1
    %444 = vsyncpa [#allocation6], 1
    %445 = vsyncpa [#allocation4], 1
    %s446 = scalar_lea.sflag [#allocation4], 1
    %447 = vsyncpa %s446, 1

</llo_original>
